<compile_context>
chip_gen: v7x
topology: tpu7x:2x2x1
jax: 0.10.0
libtpu: 0.0.40
codegen_flags: <defaults>
</compile_context>

<pallas_src>
import jax
import jax.numpy as jnp
from jax.experimental import pallas as pl
from jax.experimental.pallas import tpu as pltpu


# ---------------------------------------------------------------------------
# Kernels
# ---------------------------------------------------------------------------

def _attention_flat_kernel(x_ref, w1_ref, w2_ref, pool_ref, expand_ref,
                           alpha_ref, o_ref):
    # x_ref:      (TB, C*L)  lane-dense input block (native dtype)
    # w1_ref:     (C, C//r)  Linear1 weight (in, out), VMEM resident
    # w2_ref:     (C//r, C)  Linear2 weight (in, out), VMEM resident
    # pool_ref:   (C*L, C)   block-diagonal 1/L   (mean over L, on the MXU)
    # expand_ref: (C, C*L)   block-diagonal 1     (channel gate -> lane broadcast)
    # alpha_ref:  (1,) SMEM  PReLU slope
    # o_ref:      (TB, C*L)  lane-dense output block
    x = x_ref[...]                                                     # native dtype

    # AdaptiveAvgPool1d(1): per-channel mean over L as a matmul (MXU is idle here).
    y = jnp.dot(x, pool_ref[...], preferred_element_type=jnp.float32)   # (TB, C)

    # Linear(C -> C//r, bias=False), PReLU (single shared slope), Linear, Sigmoid.
    h = jnp.dot(y, w1_ref[...], preferred_element_type=jnp.float32)     # (TB, C//r)
    alpha = alpha_ref[0]
    h = jnp.where(h >= 0, h, alpha * h)
    s = jax.nn.sigmoid(
        jnp.dot(h, w2_ref[...], preferred_element_type=jnp.float32))    # (TB, C)

    # Broadcast the per-channel gate to all L positions, still lane-dense.
    scale = jnp.dot(s, expand_ref[...], preferred_element_type=jnp.float32)  # (TB, C*L)

    # Gate applied in f32; only the product is cast back to the I/O dtype.
    o_ref[...] = (x * scale).astype(o_ref.dtype)


def _attention_ncl_kernel(x_ref, w1_ref, w2_ref, alpha_ref, o_ref):
    # Fallback path, used when L is already a multiple of 128 (blocks lane-dense
    # as-is) or when the pool/expand helper matrices would be too large.
    x = x_ref[...]                                                     # (TB, C, L)
    y = jnp.mean(x, axis=-1, dtype=jnp.float32)                        # (TB, C)
    h = jnp.dot(y, w1_ref[...], preferred_element_type=jnp.float32)    # (TB, C//r)
    alpha = alpha_ref[0]
    h = jnp.where(h >= 0, h, alpha * h)
    s = jax.nn.sigmoid(
        jnp.dot(h, w2_ref[...], preferred_element_type=jnp.float32))   # (TB, C)
    o_ref[...] = (x * s[:, :, None]).astype(o_ref.dtype)


# ---------------------------------------------------------------------------
# Sizing helpers (padded-VMEM accounting, generation-aware budgets)
# ---------------------------------------------------------------------------

def _round_up(x, m):
    return ((x + m - 1) // m) * m


def _sublane_granule(dtype):
    # Second-minor tiling granule: 8 rows (f32), 16 (bf16), 32 (int8/fp8).
    return max(8, 32 // jnp.dtype(dtype).itemsize)


def _padded_bytes_2d(rows, cols, dtype):
    d = jnp.dtype(dtype)
    return _round_up(rows, _sublane_granule(d)) * _round_up(cols, 128) * d.itemsize


def _vmem_caps():
    """Generation-aware VMEM sizing.

    Returns (vmem_limit_bytes, block_budget_bytes): the scoped-VMEM limit for the
    compiler, and the budget for the pipelined x/out blocks (2 in + 2 out copies).
    v5e/v6e have 128 MiB VMEM; v7x has 64 MiB per TensorCore.
    """
    try:
        cap = int(pltpu.get_tpu_info().vmem_capacity_bytes)
    except Exception:  # query unavailable: assume the smallest (v7x, 64 MiB/TC)
        cap = 64 * 1024 * 1024
    vmem_limit = min(int(cap * 0.75), 100 * 1024 * 1024)   # 96 MiB v5e/v6e, 48 MiB v7x
    block_budget = int(cap * 0.40)                          # ~51 MiB v5e/v6e, ~25 MiB v7x
    return vmem_limit, block_budget


def _pick_batch_tile(batch, row_bytes, block_budget, *, align=1, min_steps=8):
    """Largest batch tile whose 2-in + 2-out pipelined copies fit `block_budget`,
    capped so the grid keeps >= min_steps steps (DMA overlap + megacore sharding),
    and aligned so the block's sublane dim is a multiple of `align` (or == batch).
    """
    tile = max(1, block_budget // (4 * row_bytes))
    tile = min(tile, max(1, pl.cdiv(batch, min_steps)))
    tile = min(tile, batch)
    if align > 1 and tile != batch:
        if tile >= align:
            tile -= tile % align
        else:
            tile = min(align, batch)   # == batch (full dim) when batch < align
    return max(tile, 1)


# ---------------------------------------------------------------------------
# Wrapper
# ---------------------------------------------------------------------------

def attention_forward(x, w1_t, w2_t, alpha, *, batch_tile=None, donate_x=False):
    """Squeeze-excite attention forward.

    x:        (B, C, L) input, PyTorch NCL layout.
    w1_t:     (C, C//r) Linear1 weight stored transposed (in, out).
    w2_t:     (C//r, C) Linear2 weight stored transposed (in, out).
    alpha:    PReLU slope, shape () or (1,) (torch default: one shared parameter).
    donate_x: set True ONLY when the caller donates x's buffer; otherwise the
              output alias would force XLA to insert a hidden full copy of x.
    """
    B, C, L = x.shape
    Cr = w1_t.shape[1]
    dt = x.dtype
    alpha1 = jnp.asarray(alpha, dtype=jnp.float32).reshape(1)

    vmem_limit, block_budget = _vmem_caps()

    # Path selection: lane-dense flat blocks whenever L would leave the lane dim
    # mostly padding, as long as the pool/expand helper matrices stay small.
    pe_bytes = (_padded_bytes_2d(C * L, C, jnp.float32)
                + _padded_bytes_2d(C, C * L, jnp.float32))
    use_flat = (L % 128 != 0) and (pe_bytes <= 8 * 1024 * 1024)
    # TODO(synk): for large C*L with L % 128 != 0, pad L up to a multiple of 128
    # instead of falling back to lane-padded 3-D blocks.

    # Resident operands are still double-buffered by the pipeline -> 2x.
    w_bytes = (_padded_bytes_2d(C, Cr, w1_t.dtype)
               + _padded_bytes_2d(Cr, C, w2_t.dtype))
    resident_bytes = 2 * (w_bytes + (pe_bytes if use_flat else 0))

    # Padded VMEM bytes of one batch row of the streamed block.
    if use_flat:
        row_bytes = _round_up(C * L, 128) * dt.itemsize
    else:
        row_bytes = _round_up(C, _sublane_granule(dt)) * _round_up(L, 128) * dt.itemsize

    if batch_tile is None:
        budget = max(block_budget - resident_bytes, 4 * row_bytes)
        batch_tile = _pick_batch_tile(B, row_bytes, budget,
                                      align=8 if use_flat else 1)
    batch_tile = max(1, min(batch_tile, B))
    grid = (pl.cdiv(B, batch_tile),)          # ragged last block is handled by Pallas

    # Advisory cost: this op is HBM-bound (one read + one write pass over x).
    itemsize = dt.itemsize
    flops = 4 * B * C * Cr + 2 * B * C * L
    if use_flat:
        flops += 4 * B * C * L * C            # pooling + gate-broadcast matmuls
    cost = pl.CostEstimate(
        flops=flops,
        transcendentals=B * C,                # sigmoid
        bytes_accessed=2 * B * C * L * itemsize + 2 * C * Cr * itemsize
        + (2 * C * C * L * 4 if use_flat else 0))

    compiler_params = pltpu.CompilerParams(
        dimension_semantics=("parallel",),    # independent batch blocks -> megacore
        vmem_limit_bytes=vmem_limit)
    io_alias = {0: 0} if donate_x else {}

    if use_flat:
        CL = C * L
        # Block-diagonal pooling ((C*L, C), entries 1/L) and gate-broadcast
        # ((C, C*L), entries 1) matrices: tiny, VMEM-resident, run on the MXU.
        # TODO(synk): precompute/cache these once per (C, L) in a real deployment.
        chan_of_col = jnp.repeat(jnp.arange(C, dtype=jnp.int32), L)      # (C*L,)
        chan = jnp.arange(C, dtype=jnp.int32)
        pool = (chan_of_col[:, None] == chan[None, :]).astype(jnp.float32) / L
        expand = (chan[:, None] == chan_of_col[None, :]).astype(jnp.float32)

        out_flat = pl.pallas_call(
            _attention_flat_kernel,
            out_shape=jax.ShapeDtypeStruct((B, CL), dt),
            grid=grid,
            in_specs=[
                # x: one lane-dense (batch_tile, C*L) block per step -> pipelined DMA.
                pl.BlockSpec((batch_tile, CL), lambda b: (b, 0)),
                # Constant index_maps -> fetched once, stay resident in VMEM.
                pl.BlockSpec((C, Cr), lambda b: (0, 0)),
                pl.BlockSpec((Cr, C), lambda b: (0, 0)),
                pl.BlockSpec((CL, C), lambda b: (0, 0)),
                pl.BlockSpec((C, CL), lambda b: (0, 0)),
                # PReLU slope: scalar in SMEM (no padded VMEM tile).
                pl.BlockSpec(memory_space=pltpu.MemorySpace.SMEM),
            ],
            out_specs=pl.BlockSpec((batch_tile, CL), lambda b: (b, 0)),
            input_output_aliases=io_alias,
            compiler_params=compiler_params,
            cost_estimate=cost,
        )(x.reshape(B, CL), w1_t, w2_t, pool, expand, alpha1)
        return out_flat.reshape(B, C, L)

    out = pl.pallas_call(
        _attention_ncl_kernel,
        out_shape=jax.ShapeDtypeStruct((B, C, L), dt),
        grid=grid,
        in_specs=[
            pl.BlockSpec((batch_tile, C, L), lambda b: (b, 0, 0)),
            pl.BlockSpec((C, Cr), lambda b: (0, 0)),
            pl.BlockSpec((Cr, C), lambda b: (0, 0)),
            pl.BlockSpec(memory_space=pltpu.MemorySpace.SMEM),
        ],
        out_specs=pl.BlockSpec((batch_tile, C, L), lambda b: (b, 0, 0)),
        input_output_aliases=io_alias,
        compiler_params=compiler_params,
        cost_estimate=cost,
    )(x, w1_t, w2_t, alpha1)
    return out


def attention_reference(x, w1_t, w2_t, alpha):
    y = jnp.mean(x, axis=-1)
    h = y @ w1_t
    h = jnp.where(h >= 0, h, jnp.asarray(alpha).reshape(()) * h)
    s = jax.nn.sigmoid(h @ w2_t)
    return x * s[:, :, None]


if __name__ == "__main__":
    key = jax.random.PRNGKey(0)
    k1, k2, k3, k4, k5, k6 = jax.random.split(key, 6)
    alpha = jnp.array([0.25], dtype=jnp.float32)          # torch PReLU default init

    # Case 1: small L (L=16) -> lane-dense flat path; auto tile gives a multi-step
    # grid with a ragged last block (B=20, tile=8 -> grid=(3,)).
    B, C, L, r = 20, 32, 16, 4
    Cr = C // r
    x = jax.random.normal(k1, (B, C, L), dtype=jnp.float32)
    w1_t = jax.random.normal(k2, (C, Cr), dtype=jnp.float32) * (1.0 / jnp.sqrt(C))
    w2_t = jax.random.normal(k3, (Cr, C), dtype=jnp.float32) * (1.0 / jnp.sqrt(Cr))
    out = jax.block_until_ready(attention_forward(x, w1_t, w2_t, alpha))
    ref = attention_reference(x, w1_t, w2_t, alpha)
    assert out.shape == x.shape and out.dtype == x.dtype
    assert jnp.allclose(out, ref, atol=1e-5, rtol=1e-5), "flat-path mismatch"

    # Case 2: L multiple of 128 -> 3-D block path (already lane-dense).
    B2, C2, L2, r2 = 4, 16, 128, 4
    x2 = jax.random.normal(k4, (B2, C2, L2), dtype=jnp.float32)
    w1b = jax.random.normal(k5, (C2, C2 // r2), dtype=jnp.float32) * (1.0 / jnp.sqrt(C2))
    w2b = jax.random.normal(k6, (C2 // r2, C2), dtype=jnp.float32) * (1.0 / jnp.sqrt(C2 // r2))
    out2 = jax.block_until_ready(attention_forward(x2, w1b, w2b, alpha))
    ref2 = attention_reference(x2, w1b, w2b, alpha)
    assert out2.shape == x2.shape and out2.dtype == x2.dtype
    assert jnp.allclose(out2, ref2, atol=1e-5, rtol=1e-5), "ncl-path mismatch"

    print("KERNEL_OK")
</pallas_src>

<mosaic_0001>
module attributes {stable_mosaic.version = 11 : i64} {
  func.func @_attention_flat_kernel(%arg0: i32, %arg1: memref<8x512xf32, #tpu.memory_space<vmem>>, %arg2: memref<32x8xf32, #tpu.memory_space<vmem>>, %arg3: memref<8x32xf32, #tpu.memory_space<vmem>>, %arg4: memref<512x32xf32, #tpu.memory_space<vmem>>, %arg5: memref<32x512xf32, #tpu.memory_space<vmem>>, %arg6: memref<1xf32, #tpu.memory_space<smem>>, %arg7: memref<8x512xf32, #tpu.memory_space<vmem>>) attributes {dimension_semantics = [#tpu.dimension_semantics<parallel>], iteration_bounds = array<i64: 3>, scalar_prefetch = 0 : i64, scratch_operands = 0 : i64, tpu.core_type = #tpu.core_type<tc>, window_params = [{transform_indices = @transform_0, window_bounds = array<i64: 8, 512>}, {pipeline_mode = #tpu.pipeline_mode<synchronous>, transform_indices = @transform_1, window_bounds = array<i64: 32, 8>}, {pipeline_mode = #tpu.pipeline_mode<synchronous>, transform_indices = @transform_2, window_bounds = array<i64: 8, 32>}, {pipeline_mode = #tpu.pipeline_mode<synchronous>, transform_indices = @transform_3, window_bounds = array<i64: 512, 32>}, {pipeline_mode = #tpu.pipeline_mode<synchronous>, transform_indices = @transform_4, window_bounds = array<i64: 32, 512>}, {transform_indices = @transform_5, window_bounds = array<i64: 1>}, {transform_indices = @transform_6, window_bounds = array<i64: 8, 512>}]} {
    %c0 = arith.constant 0 : index
    %c0_0 = arith.constant 0 : index
    %0 = vector.load %arg1[%c0, %c0_0] : memref<8x512xf32, #tpu.memory_space<vmem>>, vector<8x512xf32>
    %c0_1 = arith.constant 0 : index
    %c0_2 = arith.constant 0 : index
    %1 = vector.load %arg4[%c0_1, %c0_2] : memref<512x32xf32, #tpu.memory_space<vmem>>, vector<512x32xf32>
    %cst = arith.constant dense<0.000000e+00> : vector<8x32xf32>
    %2 = tpu.matmul %0, %1, %cst {dimension_numbers = #tpu.dot_dimension_numbers<[1], [0], [0], [1], [0, 0, 1, 1], [], []>} : vector<8x512xf32>, vector<512x32xf32>, vector<8x32xf32> -> vector<8x32xf32>
    %c0_3 = arith.constant 0 : index
    %c0_4 = arith.constant 0 : index
    %3 = vector.load %arg2[%c0_3, %c0_4] : memref<32x8xf32, #tpu.memory_space<vmem>>, vector<32x8xf32>
    %cst_5 = arith.constant dense<0.000000e+00> : vector<8x8xf32>
    %4 = tpu.matmul %2, %3, %cst_5 {dimension_numbers = #tpu.dot_dimension_numbers<[1], [0], [0], [1], [0, 0, 1, 1], [], []>} : vector<8x32xf32>, vector<32x8xf32>, vector<8x8xf32> -> vector<8x8xf32>
    %c0_6 = arith.constant 0 : index
    %5 = memref.load %arg6[%c0_6] : memref<1xf32, #tpu.memory_space<smem>>
    %cst_7 = arith.constant 0.000000e+00 : f32
    %6 = vector.broadcast %cst_7 : f32 to vector<8x8xf32>
    %7 = arith.cmpf oge, %4, %6 : vector<8x8xf32>
    %8 = vector.broadcast %5 : f32 to vector<8x8xf32>
    %9 = arith.mulf %8, %4 : vector<8x8xf32>
    %10 = arith.select %7, %4, %9 : vector<8x8xi1>, vector<8x8xf32>
    %c0_8 = arith.constant 0 : index
    %c0_9 = arith.constant 0 : index
    %11 = vector.load %arg3[%c0_8, %c0_9] : memref<8x32xf32, #tpu.memory_space<vmem>>, vector<8x32xf32>
    %cst_10 = arith.constant dense<0.000000e+00> : vector<8x32xf32>
    %12 = tpu.matmul %10, %11, %cst_10 {dimension_numbers = #tpu.dot_dimension_numbers<[1], [0], [0], [1], [0, 0, 1, 1], [], []>} : vector<8x8xf32>, vector<8x32xf32>, vector<8x32xf32> -> vector<8x32xf32>
    %13 = arith.negf %12 : vector<8x32xf32>
    %14 = math.exp %13 : vector<8x32xf32>
    %cst_11 = arith.constant 1.000000e+00 : f32
    %15 = vector.broadcast %cst_11 : f32 to vector<8x32xf32>
    %16 = arith.addf %15, %14 : vector<8x32xf32>
    %17 = arith.divf %15, %16 : vector<8x32xf32>
    %c0_12 = arith.constant 0 : index
    %c0_13 = arith.constant 0 : index
    %18 = vector.load %arg5[%c0_12, %c0_13] : memref<32x512xf32, #tpu.memory_space<vmem>>, vector<32x512xf32>
    %cst_14 = arith.constant dense<0.000000e+00> : vector<8x512xf32>
    %19 = tpu.matmul %17, %18, %cst_14 {dimension_numbers = #tpu.dot_dimension_numbers<[1], [0], [0], [1], [0, 0, 1, 1], [], []>} : vector<8x32xf32>, vector<32x512xf32>, vector<8x512xf32> -> vector<8x512xf32>
    %20 = arith.mulf %0, %19 : vector<8x512xf32>
    %c0_15 = arith.constant 0 : index
    %c0_16 = arith.constant 0 : index
    %21 = vector.load %arg7[%c0_15, %c0_16] : memref<8x512xf32, #tpu.memory_space<vmem>>, vector<8x512xf32>
    tpu.vector_store %arg7[%c0_15, %c0_16], %20 {strides = array<i32>} : memref<8x512xf32, #tpu.memory_space<vmem>>, vector<8x512xf32>,
    return
  }
  func.func @transform_0(%arg0: i32) -> (i32, i32) {
    %c0_i32 = arith.constant 0 : i32
    %c0_i32_0 = arith.constant 0 : i32
    return %arg0, %c0_i32 : i32, i32
  }
  func.func @transform_1(%arg0: i32) -> (i32, i32) {
    %c0_i32 = arith.constant 0 : i32
    %c0_i32_0 = arith.constant 0 : i32
    %c0_i32_1 = arith.constant 0 : i32
    return %c0_i32, %c0_i32_0 : i32, i32
  }
  func.func @transform_2(%arg0: i32) -> (i32, i32) {
    %c0_i32 = arith.constant 0 : i32
    %c0_i32_0 = arith.constant 0 : i32
    %c0_i32_1 = arith.constant 0 : i32
    return %c0_i32, %c0_i32_0 : i32, i32
  }
  func.func @transform_3(%arg0: i32) -> (i32, i32) {
    %c0_i32 = arith.constant 0 : i32
    %c0_i32_0 = arith.constant 0 : i32
    %c0_i32_1 = arith.constant 0 : i32
    return %c0_i32, %c0_i32_0 : i32, i32
  }
  func.func @transform_4(%arg0: i32) -> (i32, i32) {
    %c0_i32 = arith.constant 0 : i32
    %c0_i32_0 = arith.constant 0 : i32
    %c0_i32_1 = arith.constant 0 : i32
    return %c0_i32, %c0_i32_0 : i32, i32
  }
  func.func @transform_5(%arg0: i32) -> i32 {
    %c0_i32 = arith.constant 0 : i32
    %c0_i32_0 = arith.constant 0 : i32
    return %c0_i32 : i32
  }
  func.func @transform_6(%arg0: i32) -> (i32, i32) {
    %c0_i32 = arith.constant 0 : i32
    %c0_i32_0 = arith.constant 0 : i32
    return %arg0, %c0_i32 : i32, i32
  }
}

</mosaic_0001>

<llo_original>
// kernel: tpu_custom_call.1
$region0: #{tpu_custom_call.1}
  #allocation0 [shape = 'u32[]', space=smem, size = 0x4, offset = 0x4, fixed_abs, tag = 'smem constant byte address 0x4 - core index']
  #allocation1 [shape = 'u32[144,128]{1,0:T(1,128)}', space=vmem, size = 0x12000, scoped, tag = 'internal scratch']
  #allocation2 [shape = 'f32[1]{0:T(128)S(6)}', space=smem, size = 0x200, scoped, tag = 'scoped memory for tpu_custom_call.1']
  %s0 = inlined_call_operand.vmem [shape: f32[20,512], index: 0, kind: input, shape index: {}]
  %s1 = inlined_call_operand.vmem [shape: f32[32,8], index: 1, kind: input, shape index: {}]
  %s2 = inlined_call_operand.vmem [shape: f32[8,32], index: 2, kind: input, shape index: {}]
  %s3 = inlined_call_operand.vmem [shape: f32[512,32], index: 3, kind: input, shape index: {}]
  %s4 = inlined_call_operand.vmem [shape: f32[32,512], index: 4, kind: input, shape index: {}]
  %s5 = inlined_call_operand.<no memory space> [shape: f32[1], index: 5, kind: input, shape index: {}]
  %s6 = inlined_call_operand.hbm [shape: f32[20,512], index: 6, kind: output, shape index: {}]
  %s7 = sld [smem:[#allocation0]]
  $region57: #{tpu_custom_call.1} parent=0
    _
  %s9 = ssub.s32 1, %s7
  %s10 = scalar_select 0, %s9, %s7
  %11 = sst [smem:[#allocation2]] %s5
  $region1: #{tpu_custom_call.1} parent=0
    #allocation3 [shape = 'u8[32768]{0}', space=vmem, size = 0x8000, scoped, tag = 'output window, operand 0']
    #allocation4 [shape = 's32[2]{0}', space=sflag, size = 0x8, scoped, tag = 'scoped memory for tpu_custom_call.1']
    %12 = vsyncpa [#allocation4], 0
    %s13 = scalar_lea.sflag [#allocation4], 1
    %14 = vsyncpa %s13, 0
    loop: start=0, step=1, limit=5
    $region2: #{tpu_custom_call.1} parent=1 // loop_pre_header
      _
    $region3: #{tpu_custom_call.1} parent=1 // loop_header
      %s16 = sphi 0, %s20
      %p17 = scmp.ge.s32.totalorder %s16, 5
      %s26 = sphi 0, %s28
      %s29 = sphi 0, %s26
      %s30 = sphi 0, %s29
      %s46 = sphi 0, %s30
      %s50 = sphi 0, %s50
      %s52 = sphi 0, %s50
      %s53 = sphi 0, %s52
      %s67 = sphi 0, %s53
      %s71 = sphi 0, %s71
      %s73 = sphi 0, %s71
      %s74 = sphi 0, %s73
      %s88 = sphi 0, %s74
      %s92 = sphi 0, %s92
      %s94 = sphi 0, %s92
      %s95 = sphi 0, %s94
      %s109 = sphi 0, %s95
      %s113 = sphi 0, %s113
      %s115 = sphi 0, %s113
      %s116 = sphi 0, %s115
      %s130 = sphi 0, %s116
      %s134 = sphi 0, %s134
      %s136 = sphi 0, %s134
      %s137 = sphi 0, %s136
      %s151 = sphi 0, %s137
      %s157 = sphi 0, %s159
      %s160 = sphi 0, %s157
      %s161 = sphi 0, %s160
      %s177 = sphi 0, %s161
    $region4: #{tpu_custom_call.1} parent=1 // loop_header_branch
      %19 = sbr.rel (%p17) target = $region8
    $region5: #{tpu_custom_call.1} parent=1 // loop_body
      %s21 = ssub.s32 %s16, 1
      %s22 = ssub.s32 %s16, 2
      %s23 = sadd.s32 %s16, 1
      %s24 = ssub.s32 %s16, %s23
      %p25 = scmp.eq.s32.totalorder %s24, 0
      %s27 = sadd.s32 %s26, 1
      %s28 = scalar_select %p25, %s26, %s27
      %p31 = pneg %p25
      %p32 = scmp.eq.s32.totalorder %s16, 2
      %p33 = por %p31, %p32
      %p34 = scmp.ne.s32.totalorder %s26, %s29
      %p35 = scmp.eq.s32.totalorder %s16, 0
      %p36 = por %p34, %p35
      %p37 = scmp.ne.s32.totalorder %s26, %s29
      %p38 = scmp.eq.s32.totalorder %s21, 2
      %p39 = por %p37, %p38
      %p40 = scmp.ne.s32.totalorder %s29, %s30
      %p41 = scmp.eq.s32.totalorder %s21, 0
      %p42 = por %p40, %p41
      %p43 = scmp.ne.s32.totalorder %s29, %s30
      %p44 = scmp.eq.s32.totalorder %s22, 2
      %p45 = por %p43, %p44
      %p47 = scmp.ne.s32.totalorder %s30, %s46
      %p48 = scmp.eq.s32.totalorder %s22, 0
      %p49 = por %p47, %p48
      %s51 = sadd.s32 %s50, 1
      %p54 = scmp.eq.s32.totalorder %s16, 2
      %p55 = scmp.ne.s32.totalorder %s50, %s52
      %p56 = scmp.eq.s32.totalorder %s16, 0
      %p57 = por %p55, %p56
      %p58 = scmp.ne.s32.totalorder %s50, %s52
      %p59 = scmp.eq.s32.totalorder %s21, 2
      %p60 = por %p58, %p59
      %p61 = scmp.ne.s32.totalorder %s52, %s53
      %p62 = scmp.eq.s32.totalorder %s21, 0
      %p63 = por %p61, %p62
      %p64 = scmp.ne.s32.totalorder %s52, %s53
      %p65 = scmp.eq.s32.totalorder %s22, 2
      %p66 = por %p64, %p65
      %p68 = scmp.ne.s32.totalorder %s53, %s67
      %p69 = scmp.eq.s32.totalorder %s22, 0
      %p70 = por %p68, %p69
      %s72 = sadd.s32 %s71, 1
      %p75 = scmp.eq.s32.totalorder %s16, 2
      %p76 = scmp.ne.s32.totalorder %s71, %s73
      %p77 = scmp.eq.s32.totalorder %s16, 0
      %p78 = por %p76, %p77
      %p79 = scmp.ne.s32.totalorder %s71, %s73
      %p80 = scmp.eq.s32.totalorder %s21, 2
      %p81 = por %p79, %p80
      %p82 = scmp.ne.s32.totalorder %s73, %s74
      %p83 = scmp.eq.s32.totalorder %s21, 0
      %p84 = por %p82, %p83
      %p85 = scmp.ne.s32.totalorder %s73, %s74
      %p86 = scmp.eq.s32.totalorder %s22, 2
      %p87 = por %p85, %p86
      %p89 = scmp.ne.s32.totalorder %s74, %s88
      %p90 = scmp.eq.s32.totalorder %s22, 0
      %p91 = por %p89, %p90
      %s93 = sadd.s32 %s92, 1
      %p96 = scmp.eq.s32.totalorder %s16, 2
      %p97 = scmp.ne.s32.totalorder %s92, %s94
      %p98 = scmp.eq.s32.totalorder %s16, 0
      %p99 = por %p97, %p98
      %p100 = scmp.ne.s32.totalorder %s92, %s94
      %p101 = scmp.eq.s32.totalorder %s21, 2
      %p102 = por %p100, %p101
      %p103 = scmp.ne.s32.totalorder %s94, %s95
      %p104 = scmp.eq.s32.totalorder %s21, 0
      %p105 = por %p103, %p104
      %p106 = scmp.ne.s32.totalorder %s94, %s95
      %p107 = scmp.eq.s32.totalorder %s22, 2
      %p108 = por %p106, %p107
      %p110 = scmp.ne.s32.totalorder %s95, %s109
      %p111 = scmp.eq.s32.totalorder %s22, 0
      %p112 = por %p110, %p111
      %s114 = sadd.s32 %s113, 1
      %p117 = scmp.eq.s32.totalorder %s16, 2
      %p118 = scmp.ne.s32.totalorder %s113, %s115
      %p119 = scmp.eq.s32.totalorder %s16, 0
      %p120 = por %p118, %p119
      %p121 = scmp.ne.s32.totalorder %s113, %s115
      %p122 = scmp.eq.s32.totalorder %s21, 2
      %p123 = por %p121, %p122
      %p124 = scmp.ne.s32.totalorder %s115, %s116
      %p125 = scmp.eq.s32.totalorder %s21, 0
      %p126 = por %p124, %p125
      %p127 = scmp.ne.s32.totalorder %s115, %s116
      %p128 = scmp.eq.s32.totalorder %s22, 2
      %p129 = por %p127, %p128
      %p131 = scmp.ne.s32.totalorder %s116, %s130
      %p132 = scmp.eq.s32.totalorder %s22, 0
      %p133 = por %p131, %p132
      %s135 = sadd.s32 %s134, 1
      %p138 = scmp.eq.s32.totalorder %s16, 2
      %p139 = scmp.ne.s32.totalorder %s134, %s136
      %p140 = scmp.eq.s32.totalorder %s16, 0
      %p141 = por %p139, %p140
      %p142 = scmp.ne.s32.totalorder %s134, %s136
      %p143 = scmp.eq.s32.totalorder %s21, 2
      %p144 = por %p142, %p143
      %p145 = scmp.ne.s32.totalorder %s136, %s137
      %p146 = scmp.eq.s32.totalorder %s21, 0
      %p147 = por %p145, %p146
      %p148 = scmp.ne.s32.totalorder %s136, %s137
      %p149 = scmp.eq.s32.totalorder %s22, 2
      %p150 = por %p148, %p149
      %p152 = scmp.ne.s32.totalorder %s137, %s151
      %p153 = scmp.eq.s32.totalorder %s22, 0
      %p154 = por %p152, %p153
      %s155 = ssub.s32 %s16, %s23
      %p156 = scmp.eq.s32.totalorder %s155, 0
      %s158 = sadd.s32 %s157, 1
      %s159 = scalar_select %p156, %s157, %s158
      %p162 = pneg %p156
      %p163 = scmp.eq.s32.totalorder %s16, 2
      %p164 = por %p162, %p163
      %p165 = scmp.ne.s32.totalorder %s157, %s160
      %p166 = scmp.eq.s32.totalorder %s16, 0
      %p167 = por %p165, %p166
      %p168 = scmp.ne.s32.totalorder %s157, %s160
      %p169 = scmp.eq.s32.totalorder %s21, 2
      %p170 = por %p168, %p169
      %p171 = scmp.ne.s32.totalorder %s160, %s161
      %p172 = scmp.eq.s32.totalorder %s21, 0
      %p173 = por %p171, %p172
      %p174 = scmp.ne.s32.totalorder %s160, %s161
      %p175 = scmp.eq.s32.totalorder %s22, 2
      %p176 = por %p174, %p175
      %p178 = scmp.ne.s32.totalorder %s161, %s177
      %p179 = scmp.eq.s32.totalorder %s22, 0
      %p180 = por %p178, %p179
      %p181 = scmp.le.s32.totalorder 1, %s16
      %p182 = scmp.lt.s32.totalorder %s16, 4
      %p183 = pnand %p181, %p182
      %p184 = pneg %p183
      // Predicated region
      $region9: #{tpu_custom_call.1} parent=5 // pred_check
        _
      $region10: #{tpu_custom_call.1} parent=5 // pred_check_branch
        %186 = sbr.rel (%p183) target = $region12
      $region11: #{tpu_custom_call.1} parent=5 // pred_region
        %s187 = ssub.s32 %s16, 1
        // Predicated region
        $region13: #{tpu_custom_call.1} parent=11 // pred_check
          %p188 = pneg %p63
        $region14: #{tpu_custom_call.1} parent=11 // pred_check_branch
          %190 = sbr.rel (%p188) target = $region16
        $region15: #{tpu_custom_call.1} parent=11 // pred_region
          _
        $region16: #{tpu_custom_call.1} parent=11 // pred_fallthru
          _
        // Predicated region
        $region17: #{tpu_custom_call.1} parent=11 // pred_check
          %p191 = pneg %p84
        $region18: #{tpu_custom_call.1} parent=11 // pred_check_branch
          %193 = sbr.rel (%p191) target = $region20
        $region19: #{tpu_custom_call.1} parent=11 // pred_region
          _
        $region20: #{tpu_custom_call.1} parent=11 // pred_fallthru
          _
        // Predicated region
        $region21: #{tpu_custom_call.1} parent=11 // pred_check
          %p194 = pneg %p105
        $region22: #{tpu_custom_call.1} parent=11 // pred_check_branch
          %196 = sbr.rel (%p194) target = $region24
        $region23: #{tpu_custom_call.1} parent=11 // pred_region
          _
        $region24: #{tpu_custom_call.1} parent=11 // pred_fallthru
          _
        // Predicated region
        $region25: #{tpu_custom_call.1} parent=11 // pred_check
          %p197 = pneg %p126
        $region26: #{tpu_custom_call.1} parent=11 // pred_check_branch
          %199 = sbr.rel (%p197) target = $region28
        $region27: #{tpu_custom_call.1} parent=11 // pred_region
          _
        $region28: #{tpu_custom_call.1} parent=11 // pred_fallthru
          _
        // Predicated region
        $region29: #{tpu_custom_call.1} parent=11 // pred_check
          %p200 = pneg %p147
        $region30: #{tpu_custom_call.1} parent=11 // pred_check_branch
          %202 = sbr.rel (%p200) target = $region32
        $region31: #{tpu_custom_call.1} parent=11 // pred_region
          _
        $region32: #{tpu_custom_call.1} parent=11 // pred_fallthru
          _
      $region12: #{tpu_custom_call.1} parent=5 // pred_fallthru
        _
      %p203 = scmp.lt.s32.totalorder %s16, 3
      // Predicated region
      $region33: #{tpu_custom_call.1} parent=5 // pred_check
        %p204 = pneg %p203
      $region34: #{tpu_custom_call.1} parent=5 // pred_check_branch
        %206 = sbr.rel (%p204) target = $region36
      $region35: #{tpu_custom_call.1} parent=5 // pred_region
        // Predicated region
        $region37: #{tpu_custom_call.1} parent=35 // pred_check
          %p207 = pneg %p36
        $region38: #{tpu_custom_call.1} parent=35 // pred_check_branch
          %209 = sbr.rel (%p207) target = $region40
        $region39: #{tpu_custom_call.1} parent=35 // pred_region
          %p210 = scmp.lt.s32.totalorder %s16, 2
          %s211 = scalar_select %p210, %s16, 2
          %s212 = smul.addr %s211, 4
          %s213 = smul.addr %s212, 8
          %s214 = scalar_lea.vmem %s0, %s213
        $region40: #{tpu_custom_call.1} parent=35 // pred_fallthru
          _
      $region36: #{tpu_custom_call.1} parent=5 // pred_fallthru
        _
      %p215 = scmp.le.s32.totalorder 1, %s16
      %p216 = scmp.lt.s32.totalorder %s16, 4
      %p217 = pnand %p215, %p216
      %p218 = pneg %p217
      // Predicated region
      $region41: #{tpu_custom_call.1} parent=5 // pred_check
        _
      $region42: #{tpu_custom_call.1} parent=5 // pred_check_branch
        %220 = sbr.rel (%p217) target = $region44
      $region43: #{tpu_custom_call.1} parent=5 // pred_region
        %s221 = ssub.s32 %s16, 1
        %p222 = scmp.lt.s32.totalorder %s21, 2
        %s223 = scalar_select %p222, %s21, 2
        %s224 = smul.addr %s223, 4
        %s225 = smul.addr %s224, 8
        %s226 = scalar_lea.vmem %s0, %s225
        %p227 = pneg %p42
        %p228 = pneg %p39
        %p229 = pneg %p63
        %p230 = pneg %p60
        %p231 = pneg %p84
        %p232 = pneg %p81
        %p233 = pneg %p105
        %p234 = pneg %p102
        %p235 = pneg %p126
        %p236 = pneg %p123
        %p237 = pneg %p147
        %p238 = pneg %p144
        %p239 = pneg %p173
        %p240 = pneg %p170
        %s241 = sand.u32 %s160, 1
        %s242 = scalar_lea.sflag [#allocation4], %s241
        %s243 = sand.u32 %s160, 1
        %s244 = smul.addr %s243, 32
        %s245 = scalar_lea.vmem [#allocation3], %s244
        %p246 = scmp.lt.s32.totalorder %s21, 2
        %s247 = scalar_select %p246, %s21, 2
        %s248 = smul.addr %s247, 4
        %s249 = smul.addr %s248, 8
        %s250 = scalar_lea.vmem %s0, %s249
        %v251 = vld [vmem:[%s250] sm:$0xff]
        %v252 = vld [vmem:[%s250 + $0x8] sm:$0xff]
        %v253 = vld [vmem:[%s250 + $0x10] sm:$0xff]
        %v254 = vld [vmem:[%s250 + $0x18] sm:$0xff]
        %v255 = vld [vmem:[%s3] sm:$0xff]
        %v256 = vld [vmem:[%s3 + $0x8] sm:$0xff]
        %v257 = vld [vmem:[%s3 + $0x10] sm:$0xff]
        %v258 = vld [vmem:[%s3 + $0x18] sm:$0xff]
        %v259 = vld [vmem:[%s3 + $0x20] sm:$0xff]
        %v260 = vld [vmem:[%s3 + $0x28] sm:$0xff]
        %v261 = vld [vmem:[%s3 + $0x30] sm:$0xff]
        %v262 = vld [vmem:[%s3 + $0x38] sm:$0xff]
        %v263 = vld [vmem:[%s3 + $0x40] sm:$0xff]
        %v264 = vld [vmem:[%s3 + $0x48] sm:$0xff]
        %v265 = vld [vmem:[%s3 + $0x50] sm:$0xff]
        %v266 = vld [vmem:[%s3 + $0x58] sm:$0xff]
        %v267 = vld [vmem:[%s3 + $0x60] sm:$0xff]
        %v268 = vld [vmem:[%s3 + $0x68] sm:$0xff]
        %v269 = vld [vmem:[%s3 + $0x70] sm:$0xff]
        %v270 = vld [vmem:[%s3 + $0x78] sm:$0xff]
        %v271 = vld [vmem:[%s3 + $0x80] sm:$0xff]
        %v272 = vld [vmem:[%s3 + $0x88] sm:$0xff]
        %v273 = vld [vmem:[%s3 + $0x90] sm:$0xff]
        %v274 = vld [vmem:[%s3 + $0x98] sm:$0xff]
        %v275 = vld [vmem:[%s3 + $0xa0] sm:$0xff]
        %v276 = vld [vmem:[%s3 + $0xa8] sm:$0xff]
        %v277 = vld [vmem:[%s3 + $0xb0] sm:$0xff]
        %v278 = vld [vmem:[%s3 + $0xb8] sm:$0xff]
        %v279 = vld [vmem:[%s3 + $0xc0] sm:$0xff]
        %v280 = vld [vmem:[%s3 + $0xc8] sm:$0xff]
        %v281 = vld [vmem:[%s3 + $0xd0] sm:$0xff]
        %v282 = vld [vmem:[%s3 + $0xd8] sm:$0xff]
        %v283 = vld [vmem:[%s3 + $0xe0] sm:$0xff]
        %v284 = vld [vmem:[%s3 + $0xe8] sm:$0xff]
        %v285 = vld [vmem:[%s3 + $0xf0] sm:$0xff]
        %v286 = vld [vmem:[%s3 + $0xf8] sm:$0xff]
        %v287 = vld [vmem:[%s3 + $0x100] sm:$0xff]
        %v288 = vld [vmem:[%s3 + $0x108] sm:$0xff]
        %v289 = vld [vmem:[%s3 + $0x110] sm:$0xff]
        %v290 = vld [vmem:[%s3 + $0x118] sm:$0xff]
        %v291 = vld [vmem:[%s3 + $0x120] sm:$0xff]
        %v292 = vld [vmem:[%s3 + $0x128] sm:$0xff]
        %v293 = vld [vmem:[%s3 + $0x130] sm:$0xff]
        %v294 = vld [vmem:[%s3 + $0x138] sm:$0xff]
        %v295 = vld [vmem:[%s3 + $0x140] sm:$0xff]
        %v296 = vld [vmem:[%s3 + $0x148] sm:$0xff]
        %v297 = vld [vmem:[%s3 + $0x150] sm:$0xff]
        %v298 = vld [vmem:[%s3 + $0x158] sm:$0xff]
        %v299 = vld [vmem:[%s3 + $0x160] sm:$0xff]
        %v300 = vld [vmem:[%s3 + $0x168] sm:$0xff]
        %v301 = vld [vmem:[%s3 + $0x170] sm:$0xff]
        %v302 = vld [vmem:[%s3 + $0x178] sm:$0xff]
        %v303 = vld [vmem:[%s3 + $0x180] sm:$0xff]
        %v304 = vld [vmem:[%s3 + $0x188] sm:$0xff]
        %v305 = vld [vmem:[%s3 + $0x190] sm:$0xff]
        %v306 = vld [vmem:[%s3 + $0x198] sm:$0xff]
        %v307 = vld [vmem:[%s3 + $0x1a0] sm:$0xff]
        %v308 = vld [vmem:[%s3 + $0x1a8] sm:$0xff]
        %v309 = vld [vmem:[%s3 + $0x1b0] sm:$0xff]
        %v310 = vld [vmem:[%s3 + $0x1b8] sm:$0xff]
        %v311 = vld [vmem:[%s3 + $0x1c0] sm:$0xff]
        %v312 = vld [vmem:[%s3 + $0x1c8] sm:$0xff]
        %v313 = vld [vmem:[%s3 + $0x1d0] sm:$0xff]
        %v314 = vld [vmem:[%s3 + $0x1d8] sm:$0xff]
        %v315 = vld [vmem:[%s3 + $0x1e0] sm:$0xff]
        %v316 = vld [vmem:[%s3 + $0x1e8] sm:$0xff]
        %v317 = vld [vmem:[%s3 + $0x1f0] sm:$0xff]
        %v318 = vld [vmem:[%s3 + $0x1f8] sm:$0xff]
        %319 = vmatprep.subr.mxu0 0.0
        %320 = vmatpush1.msra.mxu0 %v255
        %321 = vmatprep.subr.mxu0 0.0
        %322 = vmatpush1.msra.mxu0 %v256
        %323 = vmatprep.subr.mxu0 0.0
        %324 = vmatpush1.msra.mxu0 %v257
        %325 = vmatprep.subr.mxu0 0.0
        %326 = vmatpush1.msra.mxu0 %v258
        %327 = vmatprep.subr.mxu0 0.0
        %328 = vmatpush1.msra.mxu0 %v259
        %329 = vmatprep.subr.mxu0 0.0
        %330 = vmatpush1.msra.mxu0 %v260
        %331 = vmatprep.subr.mxu0 0.0
        %332 = vmatpush1.msra.mxu0 %v261
        %333 = vmatprep.subr.mxu0 0.0
        %334 = vmatpush1.msra.mxu0 %v262
        %335 = vmatprep.subr.mxu0 0.0
        %336 = vmatpush1.msra.mxu0 %v263
        %337 = vmatprep.subr.mxu0 0.0
        %338 = vmatpush1.msra.mxu0 %v264
        %339 = vmatprep.subr.mxu0 0.0
        %340 = vmatpush1.msra.mxu0 %v265
        %341 = vmatprep.subr.mxu0 0.0
        %342 = vmatpush1.msra.mxu0 %v266
        %343 = vmatprep.subr.mxu0 0.0
        %344 = vmatpush1.msra.mxu0 %v267
        %345 = vmatprep.subr.mxu0 0.0
        %346 = vmatpush1.msra.mxu0 %v268
        %347 = vmatprep.subr.mxu0 0.0
        %348 = vmatpush1.msra.mxu0 %v269
        %349 = vmatprep.subr.mxu0 0.0
        %350 = vmatpush1.msra.mxu0 %v270
        %351 = vmatprep.subr.mxu0 0.0
        %352 = vmatpush1.msra.mxu0 %v271
        %353 = vmatprep.subr.mxu0 0.0
        %354 = vmatpush1.msra.mxu0 %v272
        %355 = vmatprep.subr.mxu0 0.0
        %356 = vmatpush1.msra.mxu0 %v273
        %357 = vmatprep.subr.mxu0 0.0
        %358 = vmatpush1.msra.mxu0 %v274
        %359 = vmatprep.subr.mxu0 0.0
        %360 = vmatpush1.msra.mxu0 %v275
        %361 = vmatprep.subr.mxu0 0.0
        %362 = vmatpush1.msra.mxu0 %v276
        %363 = vmatprep.subr.mxu0 0.0
        %364 = vmatpush1.msra.mxu0 %v277
        %365 = vmatprep.subr.mxu0 0.0
        %366 = vmatpush1.msra.mxu0 %v278
        %367 = vmatprep.subr.mxu0 0.0
        %368 = vmatpush1.msra.mxu0 %v279
        %369 = vmatprep.subr.mxu0 0.0
        %370 = vmatpush1.msra.mxu0 %v280
        %371 = vmatprep.subr.mxu0 0.0
        %372 = vmatpush1.msra.mxu0 %v281
        %373 = vmatprep.subr.mxu0 0.0
        %374 = vmatpush1.msra.mxu0 %v282
        %375 = vmatprep.subr.mxu0 0.0
        %376 = vmatpush1.msra.mxu0 %v283
        %377 = vmatprep.subr.mxu0 0.0
        %378 = vmatpush1.msra.mxu0 %v284
        %379 = vmatprep.subr.mxu0 0.0
        %380 = vmatpush1.msra.mxu0 %v285
        %381 = vmatprep.subr.mxu0 0.0
        %382 = vmatpush1.msra.mxu0 %v286
        %383 = vmatprep.mubr.f32.mxu0 %v252
        %384 = vmatmul.mubr.f32.gmra.mrb[0].mxu0 %v251
        %v385 = vpop.f32.mrb[0].mxu0
        %v386 = vadd.f32 0.0, %v385
        %v387 = vpop.f32.mrb[0].mxu0
        %388 = vdwg.mxu0
        %389 = vmatprep.subr.mxu0 0.0
        %390 = vmatpush1.msra.mxu0 %v287
        %391 = vmatprep.subr.mxu0 0.0
        %392 = vmatpush1.msra.mxu0 %v288
        %393 = vmatprep.subr.mxu0 0.0
        %394 = vmatpush1.msra.mxu0 %v289
        %395 = vmatprep.subr.mxu0 0.0
        %396 = vmatpush1.msra.mxu0 %v290
        %397 = vmatprep.subr.mxu0 0.0
        %398 = vmatpush1.msra.mxu0 %v291
        %399 = vmatprep.subr.mxu0 0.0
        %400 = vmatpush1.msra.mxu0 %v292
        %401 = vmatprep.subr.mxu0 0.0
        %402 = vmatpush1.msra.mxu0 %v293
        %403 = vmatprep.subr.mxu0 0.0
        %404 = vmatpush1.msra.mxu0 %v294
        %405 = vmatprep.subr.mxu0 0.0
        %406 = vmatpush1.msra.mxu0 %v295
        %407 = vmatprep.subr.mxu0 0.0
        %408 = vmatpush1.msra.mxu0 %v296
        %409 = vmatprep.subr.mxu0 0.0
        %410 = vmatpush1.msra.mxu0 %v297
        %411 = vmatprep.subr.mxu0 0.0
        %412 = vmatpush1.msra.mxu0 %v298
        %413 = vmatprep.subr.mxu0 0.0
        %414 = vmatpush1.msra.mxu0 %v299
        %415 = vmatprep.subr.mxu0 0.0
        %416 = vmatpush1.msra.mxu0 %v300
        %417 = vmatprep.subr.mxu0 0.0
        %418 = vmatpush1.msra.mxu0 %v301
        %419 = vmatprep.subr.mxu0 0.0
        %420 = vmatpush1.msra.mxu0 %v302
        %421 = vmatprep.subr.mxu0 0.0
        %422 = vmatpush1.msra.mxu0 %v303
        %423 = vmatprep.subr.mxu0 0.0
        %424 = vmatpush1.msra.mxu0 %v304
        %425 = vmatprep.subr.mxu0 0.0
        %426 = vmatpush1.msra.mxu0 %v305
        %427 = vmatprep.subr.mxu0 0.0
        %428 = vmatpush1.msra.mxu0 %v306
        %429 = vmatprep.subr.mxu0 0.0
        %430 = vmatpush1.msra.mxu0 %v307
        %431 = vmatprep.subr.mxu0 0.0
        %432 = vmatpush1.msra.mxu0 %v308
        %433 = vmatprep.subr.mxu0 0.0
        %434 = vmatpush1.msra.mxu0 %v309
        %435 = vmatprep.subr.mxu0 0.0
        %436 = vmatpush1.msra.mxu0 %v310
        %437 = vmatprep.subr.mxu0 0.0
        %438 = vmatpush1.msra.mxu0 %v311
        %439 = vmatprep.subr.mxu0 0.0
        %440 = vmatpush1.msra.mxu0 %v312
        %441 = vmatprep.subr.mxu0 0.0
        %442 = vmatpush1.msra.mxu0 %v313
        %443 = vmatprep.subr.mxu0 0.0
        %444 = vmatpush1.msra.mxu0 %v314
        %445 = vmatprep.subr.mxu0 0.0
        %446 = vmatpush1.msra.mxu0 %v315
        %447 = vmatprep.subr.mxu0 0.0
        %448 = vmatpush1.msra.mxu0 %v316
        %449 = vmatprep.subr.mxu0 0.0
        %450 = vmatpush1.msra.mxu0 %v317
        %451 = vmatprep.subr.mxu0 0.0
        %452 = vmatpush1.msra.mxu0 %v318
        %453 = vmatprep.mubr.f32.mxu0 %v254
        %454 = vmatmul.mubr.f32.gmra.mrb[0].mxu0 %v253
        %v455 = vpop.f32.mrb[0].mxu0
        %v456 = vadd.f32 %v386, %v455
        %v457 = vpop.f32.mrb[0].mxu0
        %458 = vdwg.mxu0
        %v459 = vld [vmem:[%s1] sm:$0xff]
        %v460 = vld [vmem:[%s1 + $0x8] sm:$0xff]
        %v461 = vld [vmem:[%s1 + $0x10] sm:$0xff]
        %v462 = vld [vmem:[%s1 + $0x18] sm:$0xff]
        %vm463 = vcmask 261120
        %v465 = vsel %vm463, %v456, 0
        %467 = vmatprep.subr.mxu0 0.0
        %468 = vmatpush1.msra.mxu0 %v459
        %469 = vmatprep.subr.mxu0 0.0
        %470 = vmatpush1.msra.mxu0 %v460
        %471 = vmatprep.subr.mxu0 0.0
        %472 = vmatpush1.msra.mxu0 %v461
        %473 = vmatprep.subr.mxu0 0.0
        %474 = vmatpush1.msra.mxu0 %v462
        %475 = vmatprep.subr.mxu0 0.0
        %476 = vmatpush1.msra.mxu0 0.0
        %477 = vmatprep.subr.mxu0 0.0
        %478 = vmatpush1.msra.mxu0 0.0
        %479 = vmatprep.subr.mxu0 0.0
        %480 = vmatpush1.msra.mxu0 0.0
        %481 = vmatprep.subr.mxu0 0.0
        %482 = vmatpush1.msra.mxu0 0.0
        %483 = vmatprep.subr.mxu0 0.0
        %484 = vmatpush1.msra.mxu0 0.0
        %485 = vmatprep.subr.mxu0 0.0
        %486 = vmatpush1.msra.mxu0 0.0
        %487 = vmatprep.subr.mxu0 0.0
        %488 = vmatpush1.msra.mxu0 0.0
        %489 = vmatprep.subr.mxu0 0.0
        %490 = vmatpush1.msra.mxu0 0.0
        %491 = vmatprep.subr.mxu0 0.0
        %492 = vmatpush1.msra.mxu0 0.0
        %493 = vmatprep.subr.mxu0 0.0
        %494 = vmatpush1.msra.mxu0 0.0
        %495 = vmatprep.subr.mxu0 0.0
        %496 = vmatpush1.msra.mxu0 0.0
        %497 = vmatprep.subr.mxu0 0.0
        %498 = vmatpush1.msra.mxu0 0.0
        %499 = vmatprep.subr.mxu0 0.0
        %500 = vmatpush1.msra.mxu0 0.0
        %501 = vmatprep.subr.mxu0 0.0
        %502 = vmatpush1.msra.mxu0 0.0
        %503 = vmatprep.subr.mxu0 0.0
        %504 = vmatpush1.msra.mxu0 0.0
        %505 = vmatprep.subr.mxu0 0.0
        %506 = vmatpush1.msra.mxu0 0.0
        %507 = vmatprep.subr.mxu0 0.0
        %508 = vmatpush1.msra.mxu0 0.0
        %509 = vmatprep.subr.mxu0 0.0
        %510 = vmatpush1.msra.mxu0 0.0
        %511 = vmatprep.subr.mxu0 0.0
        %512 = vmatpush1.msra.mxu0 0.0
        %513 = vmatprep.subr.mxu0 0.0
        %514 = vmatpush1.msra.mxu0 0.0
        %515 = vmatprep.subr.mxu0 0.0
        %516 = vmatpush1.msra.mxu0 0.0
        %517 = vmatprep.subr.mxu0 0.0
        %518 = vmatpush1.msra.mxu0 0.0
        %519 = vmatprep.subr.mxu0 0.0
        %520 = vmatpush1.msra.mxu0 0.0
        %521 = vmatprep.subr.mxu0 0.0
        %522 = vmatpush1.msra.mxu0 0.0
        %523 = vmatprep.subr.mxu0 0.0
        %524 = vmatpush1.msra.mxu0 0.0
        %525 = vmatprep.subr.mxu0 0.0
        %526 = vmatpush1.msra.mxu0 0.0
        %527 = vmatprep.subr.mxu0 0.0
        %528 = vmatpush1.msra.mxu0 0.0
        %529 = vmatprep.subr.mxu0 0.0
        %530 = vmatpush1.msra.mxu0 0.0
        %531 = vmatprep.mubr.f32.mxu0 0.0
        %532 = vmatmul.mubr.f32.gmra.mrb[0].mxu0 %v465
        %v533 = vpop.f32.mrb[0].mxu0
        %v534 = vadd.f32 0.0, %v533
        %v535 = vpop.f32.mrb[0].mxu0
        %536 = vdwg.mxu0
        %s537 = sld [smem:[#allocation2]]
        %vm538 = vcmp.ge.f32.partialorder %v534, 0.0
        %v539 = vstv %s537
        %v540 = vmul.f32 %v539, %v534
        %v541 = vsel %vm538, %v534, %v540
        %v542 = vld [vmem:[%s2] sm:$0xff]
        %vm543 = vcmask 64512
        %v545 = vsel %vm543, %v541, 0
        %547 = vmatprep.subr.mxu0 0.0
        %548 = vmatpush1.msra.mxu0 %v542
        %549 = vmatprep.subr.mxu0 0.0
        %550 = vmatpush1.msra.mxu0 0.0
        %551 = vmatprep.subr.mxu0 0.0
        %552 = vmatpush1.msra.mxu0 0.0
        %553 = vmatprep.subr.mxu0 0.0
        %554 = vmatpush1.msra.mxu0 0.0
        %555 = vmatprep.subr.mxu0 0.0
        %556 = vmatpush1.msra.mxu0 0.0
        %557 = vmatprep.subr.mxu0 0.0
        %558 = vmatpush1.msra.mxu0 0.0
        %559 = vmatprep.subr.mxu0 0.0
        %560 = vmatpush1.msra.mxu0 0.0
        %561 = vmatprep.subr.mxu0 0.0
        %562 = vmatpush1.msra.mxu0 0.0
        %563 = vmatprep.subr.mxu0 0.0
        %564 = vmatpush1.msra.mxu0 0.0
        %565 = vmatprep.subr.mxu0 0.0
        %566 = vmatpush1.msra.mxu0 0.0
        %567 = vmatprep.subr.mxu0 0.0
        %568 = vmatpush1.msra.mxu0 0.0
        %569 = vmatprep.subr.mxu0 0.0
        %570 = vmatpush1.msra.mxu0 0.0
        %571 = vmatprep.subr.mxu0 0.0
        %572 = vmatpush1.msra.mxu0 0.0
        %573 = vmatprep.subr.mxu0 0.0
        %574 = vmatpush1.msra.mxu0 0.0
        %575 = vmatprep.subr.mxu0 0.0
        %576 = vmatpush1.msra.mxu0 0.0
        %577 = vmatprep.subr.mxu0 0.0
        %578 = vmatpush1.msra.mxu0 0.0
        %579 = vmatprep.subr.mxu0 0.0
        %580 = vmatpush1.msra.mxu0 0.0
        %581 = vmatprep.subr.mxu0 0.0
        %582 = vmatpush1.msra.mxu0 0.0
        %583 = vmatprep.subr.mxu0 0.0
        %584 = vmatpush1.msra.mxu0 0.0
        %585 = vmatprep.subr.mxu0 0.0
        %586 = vmatpush1.msra.mxu0 0.0
        %587 = vmatprep.subr.mxu0 0.0
        %588 = vmatpush1.msra.mxu0 0.0
        %589 = vmatprep.subr.mxu0 0.0
        %590 = vmatpush1.msra.mxu0 0.0
        %591 = vmatprep.subr.mxu0 0.0
        %592 = vmatpush1.msra.mxu0 0.0
        %593 = vmatprep.subr.mxu0 0.0
        %594 = vmatpush1.msra.mxu0 0.0
        %595 = vmatprep.subr.mxu0 0.0
        %596 = vmatpush1.msra.mxu0 0.0
        %597 = vmatprep.subr.mxu0 0.0
        %598 = vmatpush1.msra.mxu0 0.0
        %599 = vmatprep.subr.mxu0 0.0
        %600 = vmatpush1.msra.mxu0 0.0
        %601 = vmatprep.subr.mxu0 0.0
        %602 = vmatpush1.msra.mxu0 0.0
        %603 = vmatprep.subr.mxu0 0.0
        %604 = vmatpush1.msra.mxu0 0.0
        %605 = vmatprep.subr.mxu0 0.0
        %606 = vmatpush1.msra.mxu0 0.0
        %607 = vmatprep.subr.mxu0 0.0
        %608 = vmatpush1.msra.mxu0 0.0
        %609 = vmatprep.subr.mxu0 0.0
        %610 = vmatpush1.msra.mxu0 0.0
        %611 = vmatprep.mubr.f32.mxu0 0.0
        %612 = vmatmul.mubr.f32.gmra.mrb[0].mxu0 %v545
        %v613 = vpop.f32.mrb[0].mxu0
        %v614 = vadd.f32 0.0, %v613
        %v615 = vpop.f32.mrb[0].mxu0
        %616 = vdwg.mxu0
        %v617 = vxor.u32 %v614, 2147483648
        %v618 = vmul.f32 %v617, 1.442695
        %v619 = vpow.pop %v618
        %v620 = vadd.f32 %v619, 1.0
        %v621 = vrcp.pop %v620
        %v622 = vmul.f32 1.0, %v621
        %v623 = vld [vmem:[%s4] sm:$0xff]
        %v624 = vld [vmem:[%s4 + $0x8] sm:$0xff]
        %v625 = vld [vmem:[%s4 + $0x10] sm:$0xff]
        %v626 = vld [vmem:[%s4 + $0x18] sm:$0xff]
        %v627 = vld [vmem:[%s4 + $0x20] sm:$0xff]
        %v628 = vld [vmem:[%s4 + $0x28] sm:$0xff]
        %v629 = vld [vmem:[%s4 + $0x30] sm:$0xff]
        %v630 = vld [vmem:[%s4 + $0x38] sm:$0xff]
        %v631 = vld [vmem:[%s4 + $0x40] sm:$0xff]
        %v632 = vld [vmem:[%s4 + $0x48] sm:$0xff]
        %v633 = vld [vmem:[%s4 + $0x50] sm:$0xff]
        %v634 = vld [vmem:[%s4 + $0x58] sm:$0xff]
        %v635 = vld [vmem:[%s4 + $0x60] sm:$0xff]
        %v636 = vld [vmem:[%s4 + $0x68] sm:$0xff]
        %v637 = vld [vmem:[%s4 + $0x70] sm:$0xff]
        %v638 = vld [vmem:[%s4 + $0x78] sm:$0xff]
        %v640 = vsel %vm463, %v622, 0
        %642 = vmatprep.subr.mxu0 %v624
        %643 = vmatpush1.msra.mxu0 %v623
        %644 = vmatprep.subr.mxu0 %v628
        %645 = vmatpush1.msra.mxu0 %v627
        %646 = vmatprep.subr.mxu0 %v632
        %647 = vmatpush1.msra.mxu0 %v631
        %648 = vmatprep.subr.mxu0 %v636
        %649 = vmatpush1.msra.mxu0 %v635
        %650 = vmatprep.subr.mxu0 0.0
        %651 = vmatpush1.msra.mxu0 0.0
        %652 = vmatprep.subr.mxu0 0.0
        %653 = vmatpush1.msra.mxu0 0.0
        %654 = vmatprep.subr.mxu0 0.0
        %655 = vmatpush1.msra.mxu0 0.0
        %656 = vmatprep.subr.mxu0 0.0
        %657 = vmatpush1.msra.mxu0 0.0
        %658 = vmatprep.subr.mxu0 0.0
        %659 = vmatpush1.msra.mxu0 0.0
        %660 = vmatprep.subr.mxu0 0.0
        %661 = vmatpush1.msra.mxu0 0.0
        %662 = vmatprep.subr.mxu0 0.0
        %663 = vmatpush1.msra.mxu0 0.0
        %664 = vmatprep.subr.mxu0 0.0
        %665 = vmatpush1.msra.mxu0 0.0
        %666 = vmatprep.subr.mxu0 0.0
        %667 = vmatpush1.msra.mxu0 0.0
        %668 = vmatprep.subr.mxu0 0.0
        %669 = vmatpush1.msra.mxu0 0.0
        %670 = vmatprep.subr.mxu0 0.0
        %671 = vmatpush1.msra.mxu0 0.0
        %672 = vmatprep.subr.mxu0 0.0
        %673 = vmatpush1.msra.mxu0 0.0
        %674 = vmatprep.subr.mxu0 0.0
        %675 = vmatpush1.msra.mxu0 0.0
        %676 = vmatprep.subr.mxu0 0.0
        %677 = vmatpush1.msra.mxu0 0.0
        %678 = vmatprep.subr.mxu0 0.0
        %679 = vmatpush1.msra.mxu0 0.0
        %680 = vmatprep.subr.mxu0 0.0
        %681 = vmatpush1.msra.mxu0 0.0
        %682 = vmatprep.subr.mxu0 0.0
        %683 = vmatpush1.msra.mxu0 0.0
        %684 = vmatprep.subr.mxu0 0.0
        %685 = vmatpush1.msra.mxu0 0.0
        %686 = vmatprep.subr.mxu0 0.0
        %687 = vmatpush1.msra.mxu0 0.0
        %688 = vmatprep.subr.mxu0 0.0
        %689 = vmatpush1.msra.mxu0 0.0
        %690 = vmatprep.subr.mxu0 0.0
        %691 = vmatpush1.msra.mxu0 0.0
        %692 = vmatprep.subr.mxu0 0.0
        %693 = vmatpush1.msra.mxu0 0.0
        %694 = vmatprep.subr.mxu0 0.0
        %695 = vmatpush1.msra.mxu0 0.0
        %696 = vmatprep.subr.mxu0 0.0
        %697 = vmatpush1.msra.mxu0 0.0
        %698 = vmatprep.subr.mxu0 0.0
        %699 = vmatpush1.msra.mxu0 0.0
        %700 = vmatprep.subr.mxu0 0.0
        %701 = vmatpush1.msra.mxu0 0.0
        %702 = vmatprep.subr.mxu0 0.0
        %703 = vmatpush1.msra.mxu0 0.0
        %704 = vmatprep.subr.mxu0 0.0
        %705 = vmatpush1.msra.mxu0 0.0
        %706 = vmatprep.mubr.f32.mxu0 0.0
        %707 = vmatmul.mubr.f32.gmra.mrb[0].mxu0 %v640
        %v708 = vpop.f32.mrb[0].mxu0
        %v709 = vadd.f32 0.0, %v708
        %v710 = vpop.f32.mrb[0].mxu0
        %v711 = vadd.f32 0.0, %v710
        %712 = vdwg.mxu0
        %713 = vmatprep.subr.mxu0 %v626
        %714 = vmatpush1.msra.mxu0 %v625
        %715 = vmatprep.subr.mxu0 %v630
        %716 = vmatpush1.msra.mxu0 %v629
        %717 = vmatprep.subr.mxu0 %v634
        %718 = vmatpush1.msra.mxu0 %v633
        %719 = vmatprep.subr.mxu0 %v638
        %720 = vmatpush1.msra.mxu0 %v637
        %721 = vmatprep.subr.mxu0 0.0
        %722 = vmatpush1.msra.mxu0 0.0
        %723 = vmatprep.subr.mxu0 0.0
        %724 = vmatpush1.msra.mxu0 0.0
        %725 = vmatprep.subr.mxu0 0.0
        %726 = vmatpush1.msra.mxu0 0.0
        %727 = vmatprep.subr.mxu0 0.0
        %728 = vmatpush1.msra.mxu0 0.0
        %729 = vmatprep.subr.mxu0 0.0
        %730 = vmatpush1.msra.mxu0 0.0
        %731 = vmatprep.subr.mxu0 0.0
        %732 = vmatpush1.msra.mxu0 0.0
        %733 = vmatprep.subr.mxu0 0.0
        %734 = vmatpush1.msra.mxu0 0.0
        %735 = vmatprep.subr.mxu0 0.0
        %736 = vmatpush1.msra.mxu0 0.0
        %737 = vmatprep.subr.mxu0 0.0
        %738 = vmatpush1.msra.mxu0 0.0
        %739 = vmatprep.subr.mxu0 0.0
        %740 = vmatpush1.msra.mxu0 0.0
        %741 = vmatprep.subr.mxu0 0.0
        %742 = vmatpush1.msra.mxu0 0.0
        %743 = vmatprep.subr.mxu0 0.0
        %744 = vmatpush1.msra.mxu0 0.0
        %745 = vmatprep.subr.mxu0 0.0
        %746 = vmatpush1.msra.mxu0 0.0
        %747 = vmatprep.subr.mxu0 0.0
        %748 = vmatpush1.msra.mxu0 0.0
        %749 = vmatprep.subr.mxu0 0.0
        %750 = vmatpush1.msra.mxu0 0.0
        %751 = vmatprep.subr.mxu0 0.0
        %752 = vmatpush1.msra.mxu0 0.0
        %753 = vmatprep.subr.mxu0 0.0
        %754 = vmatpush1.msra.mxu0 0.0
        %755 = vmatprep.subr.mxu0 0.0
        %756 = vmatpush1.msra.mxu0 0.0
        %757 = vmatprep.subr.mxu0 0.0
        %758 = vmatpush1.msra.mxu0 0.0
        %759 = vmatprep.subr.mxu0 0.0
        %760 = vmatpush1.msra.mxu0 0.0
        %761 = vmatprep.subr.mxu0 0.0
        %762 = vmatpush1.msra.mxu0 0.0
        %763 = vmatprep.subr.mxu0 0.0
        %764 = vmatpush1.msra.mxu0 0.0
        %765 = vmatprep.subr.mxu0 0.0
        %766 = vmatpush1.msra.mxu0 0.0
        %767 = vmatprep.subr.mxu0 0.0
        %768 = vmatpush1.msra.mxu0 0.0
        %769 = vmatprep.subr.mxu0 0.0
        %770 = vmatpush1.msra.mxu0 0.0
        %771 = vmatprep.subr.mxu0 0.0
        %772 = vmatpush1.msra.mxu0 0.0
        %773 = vmatprep.subr.mxu0 0.0
        %774 = vmatpush1.msra.mxu0 0.0
        %775 = vmatprep.subr.mxu0 0.0
        %776 = vmatpush1.msra.mxu0 0.0
        %777 = vmatprep.mubr.f32.mxu0 0.0
        %778 = vmatmul.mubr.f32.gmra.mrb[0].mxu0 %v640
        %v779 = vpop.f32.mrb[0].mxu0
        %v780 = vadd.f32 0.0, %v779
        %v781 = vpop.f32.mrb[0].mxu0
        %v782 = vadd.f32 0.0, %v781
        %783 = vdwg.mxu0
        %v784 = vmul.f32 %v251, %v709
        %v785 = vmul.f32 %v252, %v711
        %v786 = vmul.f32 %v253, %v780
        %v787 = vmul.f32 %v254, %v782
        %788 = vst [vmem:[%s245] sm:$0xff] %v784
        %789 = vst [vmem:[%s245 + $0x8] sm:$0xff] %v785
        %790 = vst [vmem:[%s245 + $0x10] sm:$0xff] %v786
        %791 = vst [vmem:[%s245 + $0x18] sm:$0xff] %v787
        %s792 = sand.u32 %s160, 1
        %s793 = scalar_lea.sflag [#allocation4], %s792
        %s794 = sand.u32 %s160, 1
        %s795 = smul.addr %s794, 32
        %s796 = scalar_lea.vmem [#allocation3], %s795
        // Predicated region
        $region45: #{tpu_custom_call.1} parent=43 // pred_check
          %p797 = pneg %p170
        $region46: #{tpu_custom_call.1} parent=43 // pred_check_branch
          %799 = sbr.rel (%p797) target = $region48
        $region47: #{tpu_custom_call.1} parent=43 // pred_region
          %s801 = ssub.s32 512, 512
          %802 = vsyncadd %s793, %s801
          %s803 = smul.addr %s21, 4
          %s804 = smul.addr %s803, 128
          %s805 = scalar_lea.hbm %s6, %s804
          %s807 = sshll.u32 %s796, 4
          %s808 = int_to_ptr.vmem [resolvable:$true] %s807
          %810 = dma.vmem_to_hbm [thread:$0]  %s808, 512, %s805, %s793
        $region48: #{tpu_custom_call.1} parent=43 // pred_fallthru
          _
      $region44: #{tpu_custom_call.1} parent=5 // pred_fallthru
        _
      %p811 = scmp.le.s32.totalorder 2, %s16
      // Predicated region
      $region49: #{tpu_custom_call.1} parent=5 // pred_check
        %p812 = pneg %p811
      $region50: #{tpu_custom_call.1} parent=5 // pred_check_branch
        %814 = sbr.rel (%p812) target = $region52
      $region51: #{tpu_custom_call.1} parent=5 // pred_region
        %s815 = ssub.s32 %s16, 2
        // Predicated region
        $region53: #{tpu_custom_call.1} parent=51 // pred_check
          %p816 = pneg %p176
        $region54: #{tpu_custom_call.1} parent=51 // pred_check_branch
          %818 = sbr.rel (%p816) target = $region56
        $region55: #{tpu_custom_call.1} parent=51 // pred_region
          %s819 = sand.u32 %s161, 1
          %s820 = scalar_lea.sflag [#allocation4], %s819
          %s821 = sand.u32 %s161, 1
          %s822 = smul.addr %s821, 32
          %s823 = scalar_lea.vmem [#allocation3], %s822
          %824 = dma.done %s820, 512
        $region56: #{tpu_custom_call.1} parent=51 // pred_fallthru
          _
      $region52: #{tpu_custom_call.1} parent=5 // pred_fallthru
        _
    $region6: #{tpu_custom_call.1} parent=1 // loop_footer
      %s20 = sadd.s32 1, %s16
    $region7: #{tpu_custom_call.1} parent=1 // loop_footer_branch
      %15 = sbr.rel target = $region3
    $region8: #{tpu_custom_call.1} parent=1 // loop_exit
      _
    %825 = vsyncpa [#allocation4], 1
    %s826 = scalar_lea.sflag [#allocation4], 1
    %827 = vsyncpa %s826, 1

</llo_original>
